<compile_context>
chip_gen: v6e
topology: v6e:2x2x1
jax: 0.10.0
libtpu: 0.0.40
codegen_flags: <defaults>
</compile_context>

<pallas_src>
import math
from functools import partial

import jax
import jax.numpy as jnp
from jax.experimental import pallas as pl
from jax.experimental.pallas import tpu as pltpu


LANE = 128
SUBLANE = 8


def _round_up(x: int, m: int) -> int:
    return (x + m - 1) // m * m


# ---------------------------------------------------------------------------
# Parameter construction (matches the classic PositionalEncoder __init__:
# sin on even channels, cos on odd channels).
# ---------------------------------------------------------------------------
def make_sinusoidal_table(max_len: int, d_emb: int) -> jnp.ndarray:
    position = jnp.arange(max_len, dtype=jnp.float32)[:, None]
    div_term = jnp.exp(
        jnp.arange(0, d_emb, 2, dtype=jnp.float32) * (-math.log(10000.0) / d_emb)
    )
    angles = position * div_term
    pe = jnp.zeros((max_len, d_emb), dtype=jnp.float32)
    pe = pe.at[:, 0::2].set(jnp.sin(angles)[:, : (d_emb + 1) // 2])
    pe = pe.at[:, 1::2].set(jnp.cos(angles)[:, : d_emb // 2])
    return pe


def init_multi_positional_encoder(max_lengths, embedding_dims):
    """Build the module 'parameters' ONCE (hoisted out of the forward path):
    the block-diagonal concatenated pe table plus per-encoder row offsets."""
    pe_tables = [make_sinusoidal_table(L, d)
                 for L, d in zip(max_lengths, embedding_dims)]
    lens = [int(L) for L in max_lengths]
    dims = [int(d) for d in embedding_dims]
    d_total = sum(dims)
    k_pad = _round_up(sum(lens), LANE)   # cheap row padding keeps the one-hot lane-tile aligned

    table = jnp.zeros((k_pad, d_total), jnp.float32)
    row_offsets = []
    r = c = 0
    for t, L, d in zip(pe_tables, lens, dims):
        table = table.at[r:r + L, c:c + d].set(t.astype(jnp.float32))
        row_offsets.append(r)
        r += L
        c += d

    return dict(table=table, row_offsets=tuple(row_offsets), dims=tuple(dims),
                d_total=d_total, k_pad=k_pad, pe_tables=pe_tables)


# ---------------------------------------------------------------------------
# Pallas kernel
#   ids_ref   : (TM, n_enc) int32  -- per-encoder row indices, pre-offset
#   table_ref : (K_pad, D)  f32    -- block-diagonal concatenated pe tables
#   out_ref   : (TM, D)     f32    -- concatenated embeddings (exact width)
# ---------------------------------------------------------------------------
def _multi_pos_encoder_kernel(n_enc, ids_ref, table_ref, out_ref):
    ids = ids_ref[...]                                    # (TM, n_enc) int32
    tm = ids.shape[0]
    k_pad = table_ref.shape[0]

    # One iota per grid step, shared by every encoder.
    iota = jax.lax.broadcasted_iota(jnp.int32, (tm, k_pad), 1)

    # Boolean accumulation (segments are disjoint); ONE convert at the end.
    hit = iota == ids[:, 0:1]
    for e in range(1, n_enc):
        hit = jnp.logical_or(hit, iota == ids[:, e:e + 1])
    onehot = hit.astype(jnp.float32)

    # Single MXU matmul -> full concatenated slab, one lane-dense store.
    # (Default matmul precision verified within 1e-5 of the f32 reference.)
    out_ref[...] = jnp.dot(onehot, table_ref[...],
                           preferred_element_type=jnp.float32)


# ---------------------------------------------------------------------------
# Wrapper helpers
# ---------------------------------------------------------------------------
def _chip_caps():
    """(vmem_limit_bytes, max token tile) per TPU generation."""
    kind = ""
    try:
        kind = jax.devices()[0].device_kind.lower()
    except Exception:
        pass
    if any(g in kind for g in ("v4", "v5", "v6")):
        return 96 * 1024 * 1024, 4096     # 128 MiB physical VMEM: big tiles
    return 40 * 1024 * 1024, 1024         # v7x / unknown: 64 MiB physical, stay conservative


def _choose_tm(T, cap):
    """Largest token tile that is a multiple of 8 AND divides T (=> no row
    padding, no post-kernel slice).  Capped so the grid has >=2 steps when T
    allows it (keeps both v7x TensorCores busy).  None if T % 8 != 0."""
    if T % SUBLANE != 0:
        return None
    cap = max(SUBLANE, min(cap, T))
    if T >= 2 * SUBLANE:
        cap = min(cap, _round_up(pl.cdiv(T, 2), SUBLANE))
    t = cap - cap % SUBLANE
    while t > SUBLANE:
        if T % t == 0:
            return t
        t -= SUBLANE
    return SUBLANE


# ---------------------------------------------------------------------------
# Forward
# ---------------------------------------------------------------------------
def multi_positional_encoder(params, positional_ids, *, tm=None):
    """positional_ids: sequence of (B, S) int arrays (one per encoder)."""
    table = params["table"]
    row_offsets = params["row_offsets"]
    d_total = int(params["d_total"])
    k_pad = int(params["k_pad"])
    n = len(row_offsets)
    assert len(positional_ids) == n and n >= 1

    B, S = positional_ids[0].shape
    T = B * S

    # Stack per-encoder ids into (T, n), each offset into its row segment.
    ids = jnp.stack(
        [pid.reshape(T).astype(jnp.int32) + off
         for pid, off in zip(positional_ids, row_offsets)],
        axis=-1,
    )

    vmem_limit, tm_gen_cap = _chip_caps()
    budget = vmem_limit * 3 // 4
    d_lane = _round_up(d_total, LANE)                        # VMEM lane-padded widths
    resident = k_pad * d_lane * 4                            # table, single-buffered
    per_tok = 2 * LANE * 4 + 2 * d_lane * 4 + 3 * k_pad * 4  # ids + out (dbuf) + onehot/iota

    if tm is None:
        tm_cap = int(min(max(SUBLANE, (budget - resident) // per_tok), tm_gen_cap))
        tm = _choose_tm(T, tm_cap)

    pad_rows = 0
    if tm is None:                       # T not a multiple of 8
        if T <= max(tm_gen_cap, SUBLANE):
            tm = T                       # single full-extent block, no padding
        else:
            tm = max(SUBLANE, (tm_gen_cap // SUBLANE) * SUBLANE)
            pad_rows = _round_up(T, tm) - T
            # Padded rows gather table row 0 (multi-hot there); sliced off below.
            ids = jnp.pad(ids, ((0, pad_rows), (0, 0)))
    t_pad = T + pad_rows
    grid = (t_pad // tm,)

    def _call(table_spec):
        return pl.pallas_call(
            partial(_multi_pos_encoder_kernel, n),
            out_shape=jax.ShapeDtypeStruct((t_pad, d_total), jnp.float32),
            grid=grid,
            in_specs=[
                pl.BlockSpec((tm, n), lambda i: (i, 0)),     # token tile of ids
                table_spec,                                  # full table, resident
            ],
            out_specs=pl.BlockSpec((tm, d_total), lambda i: (i, 0)),  # exact-width slab
            compiler_params=pltpu.CompilerParams(
                dimension_semantics=("parallel",),           # shard grid over TCs
                vmem_limit_bytes=vmem_limit,
            ),
            cost_estimate=pl.CostEstimate(
                flops=2 * t_pad * k_pad * d_total,
                transcendentals=0,
                bytes_accessed=t_pad * n * 4 + k_pad * d_total * 4 + t_pad * d_total * 4,
            ),
        )(ids, table)

    try:
        # Grid-invariant table: single VMEM buffer (its index_map is constant,
        # a second pipeline buffer would be pure VMEM waste).
        out = _call(pl.BlockSpec((k_pad, d_total), lambda i: (0, 0),
                                 pipeline_mode=pl.Buffered(1)))
    except Exception:
        # Fallback for environments without Buffered(1) support.
        out = _call(pl.BlockSpec((k_pad, d_total), lambda i: (0, 0)))

    if pad_rows:
        out = out[:T]
    return out.reshape(B, S, d_total)


# ---------------------------------------------------------------------------
# Pure-JAX reference (mirrors the PyTorch forward exactly).
# ---------------------------------------------------------------------------
def multi_positional_encoder_ref(positional_ids, pe_tables):
    encoded = [pe[ids] for pe, ids in zip(pe_tables, positional_ids)]
    return jnp.concatenate(encoded, axis=-1)


if __name__ == "__main__":
    # Module config (small): two positional encoders.
    max_lengths = [16, 32]
    embedding_dims = [8, 24]
    batch, seq = 2, 8

    # Deterministic "parameters" (sinusoidal buffers, built once at init).
    params = init_multi_positional_encoder(max_lengths, embedding_dims)

    # Deterministic example positional ids.
    key = jax.random.PRNGKey(0)
    k0, k1 = jax.random.split(key)
    pos_ids_0 = jax.random.randint(k0, (batch, seq), 0, max_lengths[0], dtype=jnp.int32)
    pos_ids_1 = jax.random.randint(k1, (batch, seq), 0, max_lengths[1], dtype=jnp.int32)
    positional_ids = [pos_ids_0, pos_ids_1]

    out = multi_positional_encoder(params, positional_ids)
    out = jax.block_until_ready(out)

    ref = multi_positional_encoder_ref(positional_ids, params["pe_tables"])
    assert out.shape == (batch, seq, sum(embedding_dims)), out.shape
    assert out.dtype == jnp.float32
    assert jnp.allclose(out, ref, atol=1e-5, rtol=1e-5), "mismatch vs reference"

    print("KERNEL_OK")
</pallas_src>

<mosaic_0001>
module attributes {stable_mosaic.version = 11 : i64} {
  func.func @_multi_pos_encoder_kernel(%arg0: i32, %arg1: memref<8x2xi32, #tpu.memory_space<vmem>>, %arg2: memref<128x32xf32, #tpu.memory_space<vmem>>, %arg3: memref<8x32xf32, #tpu.memory_space<vmem>>) attributes {dimension_semantics = [#tpu.dimension_semantics<parallel>], iteration_bounds = array<i64: 2>, scalar_prefetch = 0 : i64, scratch_operands = 0 : i64, tpu.core_type = #tpu.core_type<tc>, window_params = [{transform_indices = @transform_0, window_bounds = array<i64: 8, 2>}, {pipeline_mode = #tpu.pipeline_mode<synchronous>, transform_indices = @transform_1, window_bounds = array<i64: 128, 32>}, {transform_indices = @transform_2, window_bounds = array<i64: 8, 32>}]} {
    %c0 = arith.constant 0 : index
    %c0_0 = arith.constant 0 : index
    %0 = vector.load %arg1[%c0, %c0_0] : memref<8x2xi32, #tpu.memory_space<vmem>>, vector<8x2xi32>
    %1 = tpu.iota {dimensions = array<i32: 1>} : vector<8x128xi32>
    %2 = vector.extract_strided_slice %0 {offsets = [0, 0], sizes = [8, 1], strides = [1, 1]} : vector<8x2xi32> to vector<8x1xi32>
    %3 = vector.broadcast %2 : vector<8x1xi32> to vector<8x128xi32>
    %4 = arith.cmpi eq, %1, %3 : vector<8x128xi32>
    %5 = vector.extract_strided_slice %0 {offsets = [0, 1], sizes = [8, 1], strides = [1, 1]} : vector<8x2xi32> to vector<8x1xi32>
    %6 = vector.broadcast %5 : vector<8x1xi32> to vector<8x128xi32>
    %7 = arith.cmpi eq, %1, %6 : vector<8x128xi32>
    %8 = arith.ori %4, %7 : vector<8x128xi1>
    %9 = arith.extui %8 : vector<8x128xi1> to vector<8x128xi32>
    %10 = arith.sitofp %9 : vector<8x128xi32> to vector<8x128xf32>
    %c0_1 = arith.constant 0 : index
    %c0_2 = arith.constant 0 : index
    %11 = vector.load %arg2[%c0_1, %c0_2] : memref<128x32xf32, #tpu.memory_space<vmem>>, vector<128x32xf32>
    %cst = arith.constant dense<0.000000e+00> : vector<8x32xf32>
    %12 = tpu.matmul %10, %11, %cst {dimension_numbers = #tpu.dot_dimension_numbers<[1], [0], [0], [1], [0, 0, 1, 1], [], []>} : vector<8x128xf32>, vector<128x32xf32>, vector<8x32xf32> -> vector<8x32xf32>
    %c0_3 = arith.constant 0 : index
    %c0_4 = arith.constant 0 : index
    %13 = vector.load %arg3[%c0_3, %c0_4] : memref<8x32xf32, #tpu.memory_space<vmem>>, vector<8x32xf32>
    tpu.vector_store %arg3[%c0_3, %c0_4], %12 {strides = array<i32>} : memref<8x32xf32, #tpu.memory_space<vmem>>, vector<8x32xf32>,
    return
  }
  func.func @transform_0(%arg0: i32) -> (i32, i32) {
    %c0_i32 = arith.constant 0 : i32
    %c0_i32_0 = arith.constant 0 : i32
    return %arg0, %c0_i32 : i32, i32
  }
  func.func @transform_1(%arg0: i32) -> (i32, i32) {
    %c0_i32 = arith.constant 0 : i32
    %c0_i32_0 = arith.constant 0 : i32
    %c0_i32_1 = arith.constant 0 : i32
    return %c0_i32, %c0_i32_0 : i32, i32
  }
  func.func @transform_2(%arg0: i32) -> (i32, i32) {
    %c0_i32 = arith.constant 0 : i32
    %c0_i32_0 = arith.constant 0 : i32
    return %arg0, %c0_i32 : i32, i32
  }
}

module attributes {stable_mosaic.version = 11 : i64} {
  func.func @_multi_pos_encoder_kernel(%arg0: i32, %arg1: memref<8x2xi32, #tpu.memory_space<vmem>>, %arg2: memref<128x32xf32, #tpu.memory_space<vmem>>, %arg3: memref<8x32xf32, #tpu.memory_space<vmem>>) attributes {dimension_semantics = [#tpu.dimension_semantics<parallel>], iteration_bounds = array<i64: 2>, scalar_prefetch = 0 : i64, scratch_operands = 0 : i64, tpu.core_type = #tpu.core_type<tc>, window_params = [{transform_indices = @transform_0, window_bounds = array<i64: 8, 2>}, {pipeline_mode = #tpu.pipeline_mode<synchronous>, transform_indices = @transform_1, window_bounds = array<i64: 128, 32>}, {transform_indices = @transform_2, window_bounds = array<i64: 8, 32>}]} {
    %c0 = arith.constant 0 : index
    %c0_0 = arith.constant 0 : index
    %0 = vector.load %arg1[%c0, %c0_0] : memref<8x2xi32, #tpu.memory_space<vmem>>, vector<8x2xi32>
    %1 = tpu.iota {dimensions = array<i32: 1>} : vector<8x128xi32>
    %2 = vector.extract_strided_slice %0 {offsets = [0, 0], sizes = [8, 1], strides = [1, 1]} : vector<8x2xi32> to vector<8x1xi32>
    %3 = vector.broadcast %2 : vector<8x1xi32> to vector<8x128xi32>
    %4 = arith.cmpi eq, %1, %3 : vector<8x128xi32>
    %5 = vector.extract_strided_slice %0 {offsets = [0, 1], sizes = [8, 1], strides = [1, 1]} : vector<8x2xi32> to vector<8x1xi32>
    %6 = vector.broadcast %5 : vector<8x1xi32> to vector<8x128xi32>
    %7 = arith.cmpi eq, %1, %6 : vector<8x128xi32>
    %8 = arith.ori %4, %7 : vector<8x128xi1>
    %9 = arith.extui %8 : vector<8x128xi1> to vector<8x128xi32>
    %10 = arith.sitofp %9 : vector<8x128xi32> to vector<8x128xf32>
    %c0_1 = arith.constant 0 : index
    %c0_2 = arith.constant 0 : index
    %11 = vector.load %arg2[%c0_1, %c0_2] : memref<128x32xf32, #tpu.memory_space<vmem>>, vector<128x32xf32>
    %cst = arith.constant dense<0.000000e+00> : vector<8x32xf32>
    %12 = tpu.matmul %10, %11, %cst {dimension_numbers = #tpu.dot_dimension_numbers<[1], [0], [0], [1], [0, 0, 1, 1], [], []>} : vector<8x128xf32>, vector<128x32xf32>, vector<8x32xf32> -> vector<8x32xf32>
    %c0_3 = arith.constant 0 : index
    %c0_4 = arith.constant 0 : index
    %13 = vector.load %arg3[%c0_3, %c0_4] : memref<8x32xf32, #tpu.memory_space<vmem>>, vector<8x32xf32>
    tpu.vector_store %arg3[%c0_3, %c0_4], %12 {strides = array<i32>} : memref<8x32xf32, #tpu.memory_space<vmem>>, vector<8x32xf32>,
    return
  }
  func.func @transform_0(%arg0: i32) -> (i32, i32) {
    %c0_i32 = arith.constant 0 : i32
    %c0_i32_0 = arith.constant 0 : i32
    return %arg0, %c0_i32 : i32, i32
  }
  func.func @transform_1(%arg0: i32) -> (i32, i32) {
    %c0_i32 = arith.constant 0 : i32
    %c0_i32_0 = arith.constant 0 : i32
    %c0_i32_1 = arith.constant 0 : i32
    return %c0_i32, %c0_i32_0 : i32, i32
  }
  func.func @transform_2(%arg0: i32) -> (i32, i32) {
    %c0_i32 = arith.constant 0 : i32
    %c0_i32_0 = arith.constant 0 : i32
    return %arg0, %c0_i32 : i32, i32
  }
}

</mosaic_0001>

<llo_original>
// kernel: tpu_custom_call.1
$region0: #{tpu_custom_call.1}
  #allocation0 [shape = 'u32[]', space=smem, size = 0x4, offset = 0x4, fixed_abs, tag = 'smem constant byte address 0x4 - core index']
  #allocation1 [shape = 'u32[144,128]{1,0:T(1,128)}', space=vmem, size = 0x12000, scoped, tag = 'internal scratch']
  %s0 = inlined_call_operand.vmem [shape: s32[16,2], index: 0, kind: input, shape index: {}]
  %s1 = inlined_call_operand.vmem [shape: f32[128,32], index: 1, kind: input, shape index: {}]
  %s2 = inlined_call_operand.hbm [shape: f32[16,32], index: 2, kind: output, shape index: {}]
  %s3 = sld [smem:[#allocation0]]
  $region41: #{tpu_custom_call.1} parent=0
    _
  %s5 = ssub.s32 1, %s3
  %s6 = scalar_select 0, %s5, %s3
  $region1: #{tpu_custom_call.1} parent=0
    #allocation2 [shape = 'u8[8192]{0}', space=vmem, size = 0x2000, scoped, tag = 'output window, operand 0']
    #allocation3 [shape = 's32[2]{0}', space=sflag, size = 0x8, scoped, tag = 'scoped memory for tpu_custom_call.1']
    %7 = vsyncpa [#allocation3], 0
    %s8 = scalar_lea.sflag [#allocation3], 1
    %9 = vsyncpa %s8, 0
    loop: start=0, step=1, limit=4
    $region2: #{tpu_custom_call.1} parent=1 // loop_pre_header
      _
    $region3: #{tpu_custom_call.1} parent=1 // loop_header
      %s11 = sphi 0, %s15
      %p12 = scmp.ge.s32.totalorder %s11, 4
      %s21 = sphi 0, %s23
      %s24 = sphi 0, %s21
      %s25 = sphi 0, %s24
      %s41 = sphi 0, %s25
      %s45 = sphi 0, %s45
      %s47 = sphi 0, %s45
      %s48 = sphi 0, %s47
      %s62 = sphi 0, %s48
      %s68 = sphi 0, %s70
      %s71 = sphi 0, %s68
      %s72 = sphi 0, %s71
      %s88 = sphi 0, %s72
    $region4: #{tpu_custom_call.1} parent=1 // loop_header_branch
      %14 = sbr.rel (%p12) target = $region8
    $region5: #{tpu_custom_call.1} parent=1 // loop_body
      %s16 = ssub.s32 %s11, 1
      %s17 = ssub.s32 %s11, 2
      %s18 = sadd.s32 %s11, 1
      %s19 = ssub.s32 %s11, %s18
      %p20 = scmp.eq.s32.totalorder %s19, 0
      %s22 = sadd.s32 %s21, 1
      %s23 = scalar_select %p20, %s21, %s22
      %p26 = pneg %p20
      %p27 = scmp.eq.s32.totalorder %s11, 1
      %p28 = por %p26, %p27
      %p29 = scmp.ne.s32.totalorder %s21, %s24
      %p30 = scmp.eq.s32.totalorder %s11, 0
      %p31 = por %p29, %p30
      %p32 = scmp.ne.s32.totalorder %s21, %s24
      %p33 = scmp.eq.s32.totalorder %s16, 1
      %p34 = por %p32, %p33
      %p35 = scmp.ne.s32.totalorder %s24, %s25
      %p36 = scmp.eq.s32.totalorder %s16, 0
      %p37 = por %p35, %p36
      %p38 = scmp.ne.s32.totalorder %s24, %s25
      %p39 = scmp.eq.s32.totalorder %s17, 1
      %p40 = por %p38, %p39
      %p42 = scmp.ne.s32.totalorder %s25, %s41
      %p43 = scmp.eq.s32.totalorder %s17, 0
      %p44 = por %p42, %p43
      %s46 = sadd.s32 %s45, 1
      %p49 = scmp.eq.s32.totalorder %s11, 1
      %p50 = scmp.ne.s32.totalorder %s45, %s47
      %p51 = scmp.eq.s32.totalorder %s11, 0
      %p52 = por %p50, %p51
      %p53 = scmp.ne.s32.totalorder %s45, %s47
      %p54 = scmp.eq.s32.totalorder %s16, 1
      %p55 = por %p53, %p54
      %p56 = scmp.ne.s32.totalorder %s47, %s48
      %p57 = scmp.eq.s32.totalorder %s16, 0
      %p58 = por %p56, %p57
      %p59 = scmp.ne.s32.totalorder %s47, %s48
      %p60 = scmp.eq.s32.totalorder %s17, 1
      %p61 = por %p59, %p60
      %p63 = scmp.ne.s32.totalorder %s48, %s62
      %p64 = scmp.eq.s32.totalorder %s17, 0
      %p65 = por %p63, %p64
      %s66 = ssub.s32 %s11, %s18
      %p67 = scmp.eq.s32.totalorder %s66, 0
      %s69 = sadd.s32 %s68, 1
      %s70 = scalar_select %p67, %s68, %s69
      %p73 = pneg %p67
      %p74 = scmp.eq.s32.totalorder %s11, 1
      %p75 = por %p73, %p74
      %p76 = scmp.ne.s32.totalorder %s68, %s71
      %p77 = scmp.eq.s32.totalorder %s11, 0
      %p78 = por %p76, %p77
      %p79 = scmp.ne.s32.totalorder %s68, %s71
      %p80 = scmp.eq.s32.totalorder %s16, 1
      %p81 = por %p79, %p80
      %p82 = scmp.ne.s32.totalorder %s71, %s72
      %p83 = scmp.eq.s32.totalorder %s16, 0
      %p84 = por %p82, %p83
      %p85 = scmp.ne.s32.totalorder %s71, %s72
      %p86 = scmp.eq.s32.totalorder %s17, 1
      %p87 = por %p85, %p86
      %p89 = scmp.ne.s32.totalorder %s72, %s88
      %p90 = scmp.eq.s32.totalorder %s17, 0
      %p91 = por %p89, %p90
      %p92 = scmp.le.s32.totalorder 1, %s11
      %p93 = scmp.lt.s32.totalorder %s11, 3
      %p94 = pnand %p92, %p93
      %p95 = pneg %p94
      // Predicated region
      $region9: #{tpu_custom_call.1} parent=5 // pred_check
        _
      $region10: #{tpu_custom_call.1} parent=5 // pred_check_branch
        %97 = sbr.rel (%p94) target = $region12
      $region11: #{tpu_custom_call.1} parent=5 // pred_region
        %s98 = ssub.s32 %s11, 1
        // Predicated region
        $region13: #{tpu_custom_call.1} parent=11 // pred_check
          %p99 = pneg %p58
        $region14: #{tpu_custom_call.1} parent=11 // pred_check_branch
          %101 = sbr.rel (%p99) target = $region16
        $region15: #{tpu_custom_call.1} parent=11 // pred_region
          _
        $region16: #{tpu_custom_call.1} parent=11 // pred_fallthru
          _
      $region12: #{tpu_custom_call.1} parent=5 // pred_fallthru
        _
      %p102 = scmp.lt.s32.totalorder %s11, 2
      // Predicated region
      $region17: #{tpu_custom_call.1} parent=5 // pred_check
        %p103 = pneg %p102
      $region18: #{tpu_custom_call.1} parent=5 // pred_check_branch
        %105 = sbr.rel (%p103) target = $region20
      $region19: #{tpu_custom_call.1} parent=5 // pred_region
        // Predicated region
        $region21: #{tpu_custom_call.1} parent=19 // pred_check
          %p106 = pneg %p31
        $region22: #{tpu_custom_call.1} parent=19 // pred_check_branch
          %108 = sbr.rel (%p106) target = $region24
        $region23: #{tpu_custom_call.1} parent=19 // pred_region
          %p109 = scmp.lt.s32.totalorder %s11, 1
          %s110 = scalar_select %p109, %s11, 1
          %s111 = smul.addr %s110, 8
          %s112 = scalar_lea.vmem %s0, %s111
        $region24: #{tpu_custom_call.1} parent=19 // pred_fallthru
          _
      $region20: #{tpu_custom_call.1} parent=5 // pred_fallthru
        _
      %p113 = scmp.le.s32.totalorder 1, %s11
      %p114 = scmp.lt.s32.totalorder %s11, 3
      %p115 = pnand %p113, %p114
      %p116 = pneg %p115
      // Predicated region
      $region25: #{tpu_custom_call.1} parent=5 // pred_check
        _
      $region26: #{tpu_custom_call.1} parent=5 // pred_check_branch
        %118 = sbr.rel (%p115) target = $region28
      $region27: #{tpu_custom_call.1} parent=5 // pred_region
        %s119 = ssub.s32 %s11, 1
        %p120 = scmp.lt.s32.totalorder %s16, 1
        %s121 = scalar_select %p120, %s16, 1
        %s122 = smul.addr %s121, 8
        %s123 = scalar_lea.vmem %s0, %s122
        %p124 = pneg %p37
        %p125 = pneg %p34
        %p126 = pneg %p58
        %p127 = pneg %p55
        %p128 = pneg %p84
        %p129 = pneg %p81
        %s130 = sand.u32 %s71, 1
        %s131 = scalar_lea.sflag [#allocation3], %s130
        %s132 = sand.u32 %s71, 1
        %s133 = smul.addr %s132, 8
        %s134 = scalar_lea.vmem [#allocation2], %s133
        %p135 = scmp.lt.s32.totalorder %s16, 1
        %s136 = scalar_select %p135, %s16, 1
        %s137 = smul.addr %s136, 8
        %s138 = scalar_lea.vmem %s0, %s137
        %v139 = vld [vmem:[%s138] sm:$0xff]
        %v140 = vlaneseq
        %v141 = vand.u32 %v140, 127
        %142 = vset.pattern.permute.xlu0 0
        %143 = vperm.xlu0 %142, %v139
        %v144 = vpop.permute.xlu0 %143
        %vm145 = vcmp.eq.s32.totalorder %v141, %v144
        %146 = vset.pattern.permute.xlu0 1
        %147 = vperm.xlu0 %146, %v139
        %v148 = vpop.permute.xlu0 %147
        %vm149 = vcmp.eq.s32.totalorder %v141, %v148
        %vm150 = vmor %vm145, %vm149
        %v151 = vsel %vm150, 1, 0
        %v152 = vcvt.s32.f32 %v151
        %v153 = vld [vmem:[%s1] sm:$0xff]
        %v154 = vld [vmem:[%s1 + $0x8] sm:$0xff]
        %v155 = vld [vmem:[%s1 + $0x10] sm:$0xff]
        %v156 = vld [vmem:[%s1 + $0x18] sm:$0xff]
        %v157 = vld [vmem:[%s1 + $0x20] sm:$0xff]
        %v158 = vld [vmem:[%s1 + $0x28] sm:$0xff]
        %v159 = vld [vmem:[%s1 + $0x30] sm:$0xff]
        %v160 = vld [vmem:[%s1 + $0x38] sm:$0xff]
        %v161 = vld [vmem:[%s1 + $0x40] sm:$0xff]
        %v162 = vld [vmem:[%s1 + $0x48] sm:$0xff]
        %v163 = vld [vmem:[%s1 + $0x50] sm:$0xff]
        %v164 = vld [vmem:[%s1 + $0x58] sm:$0xff]
        %v165 = vld [vmem:[%s1 + $0x60] sm:$0xff]
        %v166 = vld [vmem:[%s1 + $0x68] sm:$0xff]
        %v167 = vld [vmem:[%s1 + $0x70] sm:$0xff]
        %v168 = vld [vmem:[%s1 + $0x78] sm:$0xff]
        %169 = vmatprep.subr.mxu0 0.0
        %170 = vmatpush1.msra.mxu0 %v168
        %171 = vmatprep.subr.mxu0 0.0
        %172 = vmatpush1.msra.mxu0 %v167
        %173 = vmatprep.subr.mxu0 0.0
        %174 = vmatpush1.msra.mxu0 %v166
        %175 = vmatprep.subr.mxu0 0.0
        %176 = vmatpush1.msra.mxu0 %v165
        %177 = vmatprep.subr.mxu0 0.0
        %178 = vmatpush1.msra.mxu0 %v164
        %179 = vmatprep.subr.mxu0 0.0
        %180 = vmatpush1.msra.mxu0 %v163
        %181 = vmatprep.subr.mxu0 0.0
        %182 = vmatpush1.msra.mxu0 %v162
        %183 = vmatprep.subr.mxu0 0.0
        %184 = vmatpush1.msra.mxu0 %v161
        %185 = vmatprep.subr.mxu0 0.0
        %186 = vmatpush1.msra.mxu0 %v160
        %187 = vmatprep.subr.mxu0 0.0
        %188 = vmatpush1.msra.mxu0 %v159
        %189 = vmatprep.subr.mxu0 0.0
        %190 = vmatpush1.msra.mxu0 %v158
        %191 = vmatprep.subr.mxu0 0.0
        %192 = vmatpush1.msra.mxu0 %v157
        %193 = vmatprep.subr.mxu0 0.0
        %194 = vmatpush1.msra.mxu0 %v156
        %195 = vmatprep.subr.mxu0 0.0
        %196 = vmatpush1.msra.mxu0 %v155
        %197 = vmatprep.subr.mxu0 0.0
        %198 = vmatpush1.msra.mxu0 %v154
        %199 = vmatprep.subr.mxu0 0.0
        %200 = vmatpush1.msra.mxu0 %v153
        %201 = vmatprep.subr.mxu0 0.0
        %202 = vmatpush2.msra.mxu0 0.0
        %203 = vmatprep.subr.mxu0 0.0
        %204 = vmatpush2.msra.mxu0 0.0
        %205 = vmatprep.subr.mxu0 0.0
        %206 = vmatpush2.msra.mxu0 0.0
        %207 = vmatprep.subr.mxu0 0.0
        %208 = vmatpush2.msra.mxu0 0.0
        %209 = vmatprep.subr.mxu0 0.0
        %210 = vmatpush2.msra.mxu0 0.0
        %211 = vmatprep.subr.mxu0 0.0
        %212 = vmatpush2.msra.mxu0 0.0
        %213 = vmatprep.subr.mxu0 0.0
        %214 = vmatpush2.msra.mxu0 0.0
        %215 = vmatprep.subr.mxu0 0.0
        %216 = vmatpush2.msra.mxu0 0.0
        %217 = vmatprep.subr.mxu0 0.0
        %218 = vmatpush2.msra.mxu0 0.0
        %219 = vmatprep.subr.mxu0 0.0
        %220 = vmatpush2.msra.mxu0 0.0
        %221 = vmatprep.subr.mxu0 0.0
        %222 = vmatpush2.msra.mxu0 0.0
        %223 = vmatprep.subr.mxu0 0.0
        %224 = vmatpush2.msra.mxu0 0.0
        %225 = vmatprep.subr.mxu0 0.0
        %226 = vmatpush2.msra.mxu0 0.0
        %227 = vmatprep.subr.mxu0 0.0
        %228 = vmatpush2.msra.mxu0 0.0
        %229 = vmatprep.subr.mxu0 0.0
        %230 = vmatpush2.msra.mxu0 0.0
        %231 = vmatprep.subr.mxu0 0.0
        %232 = vmatpush2.msra.mxu0 0.0
        %233 = vmatprep.mubr.f32.mxu0 0.0
        %234 = vmatmul.mubr.f32.gmra.mxu0 %v152
        %v235 = vpop.f32.mrf.mxu0
        %v236 = vadd.f32 0.0, %v235
        %v237 = vpop.f32.mrf.mxu0
        %238 = vdwg.mxu0
        %vm239 = vcmask 261120
        %240 = vst.msk [vmem:[%s134] sm:$0xff] %vm239, %v236
        %s241 = sand.u32 %s71, 1
        %s242 = scalar_lea.sflag [#allocation3], %s241
        %s243 = sand.u32 %s71, 1
        %s244 = smul.addr %s243, 8
        %s245 = scalar_lea.vmem [#allocation2], %s244
        // Predicated region
        $region29: #{tpu_custom_call.1} parent=27 // pred_check
          %p246 = pneg %p81
        $region30: #{tpu_custom_call.1} parent=27 // pred_check_branch
          %248 = sbr.rel (%p246) target = $region32
        $region31: #{tpu_custom_call.1} parent=27 // pred_region
          %s250 = ssub.s32 128, 128
          %251 = vsyncadd %s242, %s250
          %s252 = smul.addr %s16, 128
          %s253 = scalar_lea.hbm %s2, %s252
          %s255 = sshll.u32 %s245, 4
          %s256 = int_to_ptr.vmem [resolvable:$true] %s255
          %258 = dma.vmem_to_hbm [thread:$0]  %s256, 128, %s253, %s242
        $region32: #{tpu_custom_call.1} parent=27 // pred_fallthru
          _
      $region28: #{tpu_custom_call.1} parent=5 // pred_fallthru
        _
      %p259 = scmp.le.s32.totalorder 2, %s11
      // Predicated region
      $region33: #{tpu_custom_call.1} parent=5 // pred_check
        %p260 = pneg %p259
      $region34: #{tpu_custom_call.1} parent=5 // pred_check_branch
        %262 = sbr.rel (%p260) target = $region36
      $region35: #{tpu_custom_call.1} parent=5 // pred_region
        %s263 = ssub.s32 %s11, 2
        // Predicated region
        $region37: #{tpu_custom_call.1} parent=35 // pred_check
          %p264 = pneg %p87
        $region38: #{tpu_custom_call.1} parent=35 // pred_check_branch
          %266 = sbr.rel (%p264) target = $region40
        $region39: #{tpu_custom_call.1} parent=35 // pred_region
          %s267 = sand.u32 %s72, 1
          %s268 = scalar_lea.sflag [#allocation3], %s267
          %s269 = sand.u32 %s72, 1
          %s270 = smul.addr %s269, 8
          %s271 = scalar_lea.vmem [#allocation2], %s270
          %272 = dma.done %s268, 128
        $region40: #{tpu_custom_call.1} parent=35 // pred_fallthru
          _
      $region36: #{tpu_custom_call.1} parent=5 // pred_fallthru
        _
    $region6: #{tpu_custom_call.1} parent=1 // loop_footer
      %s15 = sadd.s32 1, %s11
    $region7: #{tpu_custom_call.1} parent=1 // loop_footer_branch
      %10 = sbr.rel target = $region3
    $region8: #{tpu_custom_call.1} parent=1 // loop_exit
      _
    %273 = vsyncpa [#allocation3], 1
    %s274 = scalar_lea.sflag [#allocation3], 1
    %275 = vsyncpa %s274, 1

// kernel: tpu_custom_call.1
$region0: #{tpu_custom_call.1}
  #allocation0 [shape = 'u32[]', space=smem, size = 0x4, offset = 0x4, fixed_abs, tag = 'smem constant byte address 0x4 - core index']
  #allocation1 [shape = 'u32[144,128]{1,0:T(1,128)}', space=vmem, size = 0x12000, scoped, tag = 'internal scratch']
  %s0 = inlined_call_operand.vmem [shape: s32[16,2], index: 0, kind: input, shape index: {}]
  %s1 = inlined_call_operand.vmem [shape: f32[128,32], index: 1, kind: input, shape index: {}]
  %s2 = inlined_call_operand.hbm [shape: f32[16,32], index: 2, kind: output, shape index: {}]
  %s3 = sld [smem:[#allocation0]]
  $region41: #{tpu_custom_call.1} parent=0
    _
  %s5 = ssub.s32 1, %s3
  %s6 = scalar_select 0, %s5, %s3
  $region1: #{tpu_custom_call.1} parent=0
    #allocation2 [shape = 'u8[8192]{0}', space=vmem, size = 0x2000, scoped, tag = 'output window, operand 0']
    #allocation3 [shape = 's32[2]{0}', space=sflag, size = 0x8, scoped, tag = 'scoped memory for tpu_custom_call.1']
    %7 = vsyncpa [#allocation3], 0
    %s8 = scalar_lea.sflag [#allocation3], 1
    %9 = vsyncpa %s8, 0
    loop: start=0, step=1, limit=4
    $region2: #{tpu_custom_call.1} parent=1 // loop_pre_header
      _
    $region3: #{tpu_custom_call.1} parent=1 // loop_header
      %s11 = sphi 0, %s15
      %p12 = scmp.ge.s32.totalorder %s11, 4
      %s21 = sphi 0, %s23
      %s24 = sphi 0, %s21
      %s25 = sphi 0, %s24
      %s41 = sphi 0, %s25
      %s45 = sphi 0, %s45
      %s47 = sphi 0, %s45
      %s48 = sphi 0, %s47
      %s62 = sphi 0, %s48
      %s68 = sphi 0, %s70
      %s71 = sphi 0, %s68
      %s72 = sphi 0, %s71
      %s88 = sphi 0, %s72
    $region4: #{tpu_custom_call.1} parent=1 // loop_header_branch
      %14 = sbr.rel (%p12) target = $region8
    $region5: #{tpu_custom_call.1} parent=1 // loop_body
      %s16 = ssub.s32 %s11, 1
      %s17 = ssub.s32 %s11, 2
      %s18 = sadd.s32 %s11, 1
      %s19 = ssub.s32 %s11, %s18
      %p20 = scmp.eq.s32.totalorder %s19, 0
      %s22 = sadd.s32 %s21, 1
      %s23 = scalar_select %p20, %s21, %s22
      %p26 = pneg %p20
      %p27 = scmp.eq.s32.totalorder %s11, 1
      %p28 = por %p26, %p27
      %p29 = scmp.ne.s32.totalorder %s21, %s24
      %p30 = scmp.eq.s32.totalorder %s11, 0
      %p31 = por %p29, %p30
      %p32 = scmp.ne.s32.totalorder %s21, %s24
      %p33 = scmp.eq.s32.totalorder %s16, 1
      %p34 = por %p32, %p33
      %p35 = scmp.ne.s32.totalorder %s24, %s25
      %p36 = scmp.eq.s32.totalorder %s16, 0
      %p37 = por %p35, %p36
      %p38 = scmp.ne.s32.totalorder %s24, %s25
      %p39 = scmp.eq.s32.totalorder %s17, 1
      %p40 = por %p38, %p39
      %p42 = scmp.ne.s32.totalorder %s25, %s41
      %p43 = scmp.eq.s32.totalorder %s17, 0
      %p44 = por %p42, %p43
      %s46 = sadd.s32 %s45, 1
      %p49 = scmp.eq.s32.totalorder %s11, 1
      %p50 = scmp.ne.s32.totalorder %s45, %s47
      %p51 = scmp.eq.s32.totalorder %s11, 0
      %p52 = por %p50, %p51
      %p53 = scmp.ne.s32.totalorder %s45, %s47
      %p54 = scmp.eq.s32.totalorder %s16, 1
      %p55 = por %p53, %p54
      %p56 = scmp.ne.s32.totalorder %s47, %s48
      %p57 = scmp.eq.s32.totalorder %s16, 0
      %p58 = por %p56, %p57
      %p59 = scmp.ne.s32.totalorder %s47, %s48
      %p60 = scmp.eq.s32.totalorder %s17, 1
      %p61 = por %p59, %p60
      %p63 = scmp.ne.s32.totalorder %s48, %s62
      %p64 = scmp.eq.s32.totalorder %s17, 0
      %p65 = por %p63, %p64
      %s66 = ssub.s32 %s11, %s18
      %p67 = scmp.eq.s32.totalorder %s66, 0
      %s69 = sadd.s32 %s68, 1
      %s70 = scalar_select %p67, %s68, %s69
      %p73 = pneg %p67
      %p74 = scmp.eq.s32.totalorder %s11, 1
      %p75 = por %p73, %p74
      %p76 = scmp.ne.s32.totalorder %s68, %s71
      %p77 = scmp.eq.s32.totalorder %s11, 0
      %p78 = por %p76, %p77
      %p79 = scmp.ne.s32.totalorder %s68, %s71
      %p80 = scmp.eq.s32.totalorder %s16, 1
      %p81 = por %p79, %p80
      %p82 = scmp.ne.s32.totalorder %s71, %s72
      %p83 = scmp.eq.s32.totalorder %s16, 0
      %p84 = por %p82, %p83
      %p85 = scmp.ne.s32.totalorder %s71, %s72
      %p86 = scmp.eq.s32.totalorder %s17, 1
      %p87 = por %p85, %p86
      %p89 = scmp.ne.s32.totalorder %s72, %s88
      %p90 = scmp.eq.s32.totalorder %s17, 0
      %p91 = por %p89, %p90
      %p92 = scmp.le.s32.totalorder 1, %s11
      %p93 = scmp.lt.s32.totalorder %s11, 3
      %p94 = pnand %p92, %p93
      %p95 = pneg %p94
      // Predicated region
      $region9: #{tpu_custom_call.1} parent=5 // pred_check
        _
      $region10: #{tpu_custom_call.1} parent=5 // pred_check_branch
        %97 = sbr.rel (%p94) target = $region12
      $region11: #{tpu_custom_call.1} parent=5 // pred_region
        %s98 = ssub.s32 %s11, 1
        // Predicated region
        $region13: #{tpu_custom_call.1} parent=11 // pred_check
          %p99 = pneg %p58
        $region14: #{tpu_custom_call.1} parent=11 // pred_check_branch
          %101 = sbr.rel (%p99) target = $region16
        $region15: #{tpu_custom_call.1} parent=11 // pred_region
          _
        $region16: #{tpu_custom_call.1} parent=11 // pred_fallthru
          _
      $region12: #{tpu_custom_call.1} parent=5 // pred_fallthru
        _
      %p102 = scmp.lt.s32.totalorder %s11, 2
      // Predicated region
      $region17: #{tpu_custom_call.1} parent=5 // pred_check
        %p103 = pneg %p102
      $region18: #{tpu_custom_call.1} parent=5 // pred_check_branch
        %105 = sbr.rel (%p103) target = $region20
      $region19: #{tpu_custom_call.1} parent=5 // pred_region
        // Predicated region
        $region21: #{tpu_custom_call.1} parent=19 // pred_check
          %p106 = pneg %p31
        $region22: #{tpu_custom_call.1} parent=19 // pred_check_branch
          %108 = sbr.rel (%p106) target = $region24
        $region23: #{tpu_custom_call.1} parent=19 // pred_region
          %p109 = scmp.lt.s32.totalorder %s11, 1
          %s110 = scalar_select %p109, %s11, 1
          %s111 = smul.addr %s110, 8
          %s112 = scalar_lea.vmem %s0, %s111
        $region24: #{tpu_custom_call.1} parent=19 // pred_fallthru
          _
      $region20: #{tpu_custom_call.1} parent=5 // pred_fallthru
        _
      %p113 = scmp.le.s32.totalorder 1, %s11
      %p114 = scmp.lt.s32.totalorder %s11, 3
      %p115 = pnand %p113, %p114
      %p116 = pneg %p115
      // Predicated region
      $region25: #{tpu_custom_call.1} parent=5 // pred_check
        _
      $region26: #{tpu_custom_call.1} parent=5 // pred_check_branch
        %118 = sbr.rel (%p115) target = $region28
      $region27: #{tpu_custom_call.1} parent=5 // pred_region
        %s119 = ssub.s32 %s11, 1
        %p120 = scmp.lt.s32.totalorder %s16, 1
        %s121 = scalar_select %p120, %s16, 1
        %s122 = smul.addr %s121, 8
        %s123 = scalar_lea.vmem %s0, %s122
        %p124 = pneg %p37
        %p125 = pneg %p34
        %p126 = pneg %p58
        %p127 = pneg %p55
        %p128 = pneg %p84
        %p129 = pneg %p81
        %s130 = sand.u32 %s71, 1
        %s131 = scalar_lea.sflag [#allocation3], %s130
        %s132 = sand.u32 %s71, 1
        %s133 = smul.addr %s132, 8
        %s134 = scalar_lea.vmem [#allocation2], %s133
        %p135 = scmp.lt.s32.totalorder %s16, 1
        %s136 = scalar_select %p135, %s16, 1
        %s137 = smul.addr %s136, 8
        %s138 = scalar_lea.vmem %s0, %s137
        %v139 = vld [vmem:[%s138] sm:$0xff]
        %v140 = vlaneseq
        %v141 = vand.u32 %v140, 127
        %142 = vset.pattern.permute.xlu0 0
        %143 = vperm.xlu0 %142, %v139
        %v144 = vpop.permute.xlu0 %143
        %vm145 = vcmp.eq.s32.totalorder %v141, %v144
        %146 = vset.pattern.permute.xlu0 1
        %147 = vperm.xlu0 %146, %v139
        %v148 = vpop.permute.xlu0 %147
        %vm149 = vcmp.eq.s32.totalorder %v141, %v148
        %vm150 = vmor %vm145, %vm149
        %v151 = vsel %vm150, 1, 0
        %v152 = vcvt.s32.f32 %v151
        %v153 = vld [vmem:[%s1] sm:$0xff]
        %v154 = vld [vmem:[%s1 + $0x8] sm:$0xff]
        %v155 = vld [vmem:[%s1 + $0x10] sm:$0xff]
        %v156 = vld [vmem:[%s1 + $0x18] sm:$0xff]
        %v157 = vld [vmem:[%s1 + $0x20] sm:$0xff]
        %v158 = vld [vmem:[%s1 + $0x28] sm:$0xff]
        %v159 = vld [vmem:[%s1 + $0x30] sm:$0xff]
        %v160 = vld [vmem:[%s1 + $0x38] sm:$0xff]
        %v161 = vld [vmem:[%s1 + $0x40] sm:$0xff]
        %v162 = vld [vmem:[%s1 + $0x48] sm:$0xff]
        %v163 = vld [vmem:[%s1 + $0x50] sm:$0xff]
        %v164 = vld [vmem:[%s1 + $0x58] sm:$0xff]
        %v165 = vld [vmem:[%s1 + $0x60] sm:$0xff]
        %v166 = vld [vmem:[%s1 + $0x68] sm:$0xff]
        %v167 = vld [vmem:[%s1 + $0x70] sm:$0xff]
        %v168 = vld [vmem:[%s1 + $0x78] sm:$0xff]
        %169 = vmatprep.subr.mxu0 0.0
        %170 = vmatpush1.msra.mxu0 %v168
        %171 = vmatprep.subr.mxu0 0.0
        %172 = vmatpush1.msra.mxu0 %v167
        %173 = vmatprep.subr.mxu0 0.0
        %174 = vmatpush1.msra.mxu0 %v166
        %175 = vmatprep.subr.mxu0 0.0
        %176 = vmatpush1.msra.mxu0 %v165
        %177 = vmatprep.subr.mxu0 0.0
        %178 = vmatpush1.msra.mxu0 %v164
        %179 = vmatprep.subr.mxu0 0.0
        %180 = vmatpush1.msra.mxu0 %v163
        %181 = vmatprep.subr.mxu0 0.0
        %182 = vmatpush1.msra.mxu0 %v162
        %183 = vmatprep.subr.mxu0 0.0
        %184 = vmatpush1.msra.mxu0 %v161
        %185 = vmatprep.subr.mxu0 0.0
        %186 = vmatpush1.msra.mxu0 %v160
        %187 = vmatprep.subr.mxu0 0.0
        %188 = vmatpush1.msra.mxu0 %v159
        %189 = vmatprep.subr.mxu0 0.0
        %190 = vmatpush1.msra.mxu0 %v158
        %191 = vmatprep.subr.mxu0 0.0
        %192 = vmatpush1.msra.mxu0 %v157
        %193 = vmatprep.subr.mxu0 0.0
        %194 = vmatpush1.msra.mxu0 %v156
        %195 = vmatprep.subr.mxu0 0.0
        %196 = vmatpush1.msra.mxu0 %v155
        %197 = vmatprep.subr.mxu0 0.0
        %198 = vmatpush1.msra.mxu0 %v154
        %199 = vmatprep.subr.mxu0 0.0
        %200 = vmatpush1.msra.mxu0 %v153
        %201 = vmatprep.subr.mxu0 0.0
        %202 = vmatpush2.msra.mxu0 0.0
        %203 = vmatprep.subr.mxu0 0.0
        %204 = vmatpush2.msra.mxu0 0.0
        %205 = vmatprep.subr.mxu0 0.0
        %206 = vmatpush2.msra.mxu0 0.0
        %207 = vmatprep.subr.mxu0 0.0
        %208 = vmatpush2.msra.mxu0 0.0
        %209 = vmatprep.subr.mxu0 0.0
        %210 = vmatpush2.msra.mxu0 0.0
        %211 = vmatprep.subr.mxu0 0.0
        %212 = vmatpush2.msra.mxu0 0.0
        %213 = vmatprep.subr.mxu0 0.0
        %214 = vmatpush2.msra.mxu0 0.0
        %215 = vmatprep.subr.mxu0 0.0
        %216 = vmatpush2.msra.mxu0 0.0
        %217 = vmatprep.subr.mxu0 0.0
        %218 = vmatpush2.msra.mxu0 0.0
        %219 = vmatprep.subr.mxu0 0.0
        %220 = vmatpush2.msra.mxu0 0.0
        %221 = vmatprep.subr.mxu0 0.0
        %222 = vmatpush2.msra.mxu0 0.0
        %223 = vmatprep.subr.mxu0 0.0
        %224 = vmatpush2.msra.mxu0 0.0
        %225 = vmatprep.subr.mxu0 0.0
        %226 = vmatpush2.msra.mxu0 0.0
        %227 = vmatprep.subr.mxu0 0.0
        %228 = vmatpush2.msra.mxu0 0.0
        %229 = vmatprep.subr.mxu0 0.0
        %230 = vmatpush2.msra.mxu0 0.0
        %231 = vmatprep.subr.mxu0 0.0
        %232 = vmatpush2.msra.mxu0 0.0
        %233 = vmatprep.mubr.f32.mxu0 0.0
        %234 = vmatmul.mubr.f32.gmra.mxu0 %v152
        %v235 = vpop.f32.mrf.mxu0
        %v236 = vadd.f32 0.0, %v235
        %v237 = vpop.f32.mrf.mxu0
        %238 = vdwg.mxu0
        %vm239 = vcmask 261120
        %240 = vst.msk [vmem:[%s134] sm:$0xff] %vm239, %v236
        %s241 = sand.u32 %s71, 1
        %s242 = scalar_lea.sflag [#allocation3], %s241
        %s243 = sand.u32 %s71, 1
        %s244 = smul.addr %s243, 8
        %s245 = scalar_lea.vmem [#allocation2], %s244
        // Predicated region
        $region29: #{tpu_custom_call.1} parent=27 // pred_check
          %p246 = pneg %p81
        $region30: #{tpu_custom_call.1} parent=27 // pred_check_branch
          %248 = sbr.rel (%p246) target = $region32
        $region31: #{tpu_custom_call.1} parent=27 // pred_region
          %s250 = ssub.s32 128, 128
          %251 = vsyncadd %s242, %s250
          %s252 = smul.addr %s16, 128
          %s253 = scalar_lea.hbm %s2, %s252
          %s255 = sshll.u32 %s245, 4
          %s256 = int_to_ptr.vmem [resolvable:$true] %s255
          %258 = dma.vmem_to_hbm [thread:$0]  %s256, 128, %s253, %s242
        $region32: #{tpu_custom_call.1} parent=27 // pred_fallthru
          _
      $region28: #{tpu_custom_call.1} parent=5 // pred_fallthru
        _
      %p259 = scmp.le.s32.totalorder 2, %s11
      // Predicated region
      $region33: #{tpu_custom_call.1} parent=5 // pred_check
        %p260 = pneg %p259
      $region34: #{tpu_custom_call.1} parent=5 // pred_check_branch
        %262 = sbr.rel (%p260) target = $region36
      $region35: #{tpu_custom_call.1} parent=5 // pred_region
        %s263 = ssub.s32 %s11, 2
        // Predicated region
        $region37: #{tpu_custom_call.1} parent=35 // pred_check
          %p264 = pneg %p87
        $region38: #{tpu_custom_call.1} parent=35 // pred_check_branch
          %266 = sbr.rel (%p264) target = $region40
        $region39: #{tpu_custom_call.1} parent=35 // pred_region
          %s267 = sand.u32 %s72, 1
          %s268 = scalar_lea.sflag [#allocation3], %s267
          %s269 = sand.u32 %s72, 1
          %s270 = smul.addr %s269, 8
          %s271 = scalar_lea.vmem [#allocation2], %s270
          %272 = dma.done %s268, 128
        $region40: #{tpu_custom_call.1} parent=35 // pred_fallthru
          _
      $region36: #{tpu_custom_call.1} parent=5 // pred_fallthru
        _
    $region6: #{tpu_custom_call.1} parent=1 // loop_footer
      %s15 = sadd.s32 1, %s11
    $region7: #{tpu_custom_call.1} parent=1 // loop_footer_branch
      %10 = sbr.rel target = $region3
    $region8: #{tpu_custom_call.1} parent=1 // loop_exit
      _
    %273 = vsyncpa [#allocation3], 1
    %s274 = scalar_lea.sflag [#allocation3], 1
    %275 = vsyncpa %s274, 1

</llo_original>
